<compile_context>
chip_gen: v5e
topology: v5e:2x2
jax: 0.10.0
libtpu: 0.0.40
codegen_flags: <defaults>
</compile_context>

<pallas_src>
import functools

import jax
import jax.numpy as jnp
from jax.experimental import pallas as pl
from jax.experimental.pallas import tpu as pltpu


def _dwconv_kernel(x_ref, w_ref, b_ref, o_ref, *, width, cs):
    """Depthwise 3x3 conv on one (batch, channel-tile) block, NCHW-native.

    x_ref: (1, tc, HW)  input block  (channels -> sublanes, H*W -> lanes)
    w_ref: (tc, 9)      per-channel 3x3 taps, row-major (kh*3 + kw), f32
    b_ref: (tc, 1)      per-channel bias, f32
    o_ref: (1, tc, HW)  output block
    """
    f32 = jnp.float32
    hw = x_ref.shape[-1]
    tc = x_ref.shape[-2]
    w_ = width

    # Tiny border masks over the flattened spatial axis (HW/128 vregs each),
    # computed once per grid step and reused by every channel strip.
    pos = jax.lax.broadcasted_iota(jnp.int32, (1, hw), 1)
    col = pos % w_
    keep_l = (col != (w_ - 1)).astype(f32)    # zero source col W-1 (kw==0 taps)
    keep_r = (col != 0).astype(f32)           # zero source col 0   (kw==2 taps)
    not_top = (pos >= w_).astype(f32)         # kills the circular wrap of kh==0 taps
    not_bot = (pos < (hw - w_)).astype(f32)   # kills the circular wrap of kh==2 taps

    def shift(src, off):
        # y[p] = src[p + off] (circular); callers mask the wrapped region.
        sh = (-off) % hw
        return pltpu.roll(src, shift=sh, axis=1) if sh else src

    nstrips = tc // cs

    def strip(i, carry):
        s0 = pl.multiple_of(i * cs, cs)
        x = x_ref[0, pl.ds(s0, cs), :].astype(f32)   # (cs, HW); cast once per strip
        w = w_ref[pl.ds(s0, cs), :].astype(f32)      # (cs, 9)
        b = b_ref[pl.ds(s0, cs), :].astype(f32)      # (cs, 1)

        x_l = x * keep_l                             # for kw == 0 taps
        x_r = x * keep_r                             # for kw == 2 taps

        def tap(src, off, k):
            return shift(src, off) * w[:, k:k + 1]

        # Tap (kh, kw) reads x[p + (kh-1)*W + (kw-1)].
        top = tap(x_l, -w_ - 1, 0) + tap(x, -w_, 1) + tap(x_r, -w_ + 1, 2)
        mid = tap(x_l, -1, 3) + x * w[:, 4:5] + tap(x_r, 1, 5)
        bot = tap(x_l, w_ - 1, 6) + tap(x, w_, 7) + tap(x_r, w_ + 1, 8)

        acc = mid + top * not_top + bot * not_bot + b
        o_ref[0, pl.ds(s0, cs), :] = acc.astype(o_ref.dtype)
        return carry

    jax.lax.fori_loop(0, nstrips, strip, 0)


def _vmem_limit_bytes():
    cap = 64 * 1024 * 1024
    try:
        info = pltpu.get_tpu_info()
        cap = int(getattr(info, "vmem_capacity_bytes", cap))
    except Exception:
        pass
    # 128 MiB parts (v5e/v6e) -> 96 MiB; 64 MiB parts (v7x) -> 48 MiB.
    return max(32 * 1024 * 1024, min(cap * 3 // 4, 96 * 1024 * 1024))


def _pick_tiles(n, c, hw, itemsize, vmem_limit):
    """Channel tile (tc) and in-kernel channel strip (cs)."""
    budget = int(vmem_limit * 0.45)
    cands = sorted({d for d in range(8, c + 1, 8) if c % d == 0} | {c},
                   reverse=True)
    tc = cands[-1]
    for d in cands:
        cs_d = 16 if d % 16 == 0 else (8 if d % 8 == 0 else d)
        # in + out blocks double-buffered + per-strip f32 temporaries (generous).
        per_step = 4 * d * hw * itemsize + 12 * cs_d * hw * 4
        if per_step <= budget:
            tc = d
            break
    # Prefer >= 4 grid steps so double-buffering has something to overlap and
    # both TensorCores (v7x) get work, without making blocks tiny.
    while (n * (c // tc) < 4 and tc % 2 == 0 and (tc // 2) % 8 == 0
           and tc // 2 >= 64 and c % (tc // 2) == 0):
        tc //= 2
    cs = 16 if tc % 16 == 0 else (8 if tc % 8 == 0 else tc)
    return tc, cs


@jax.jit
def dwconv_attention(x_nchw, weight, bias):
    """nn.Conv2d(dim, dim, 3, 1, 1, bias=True, groups=dim) on NCHW input.

    Args:
      x_nchw: (N, C, H, W)
      weight: (C, 1, 3, 3)  PyTorch depthwise layout
      bias:   (C,)
    Returns:
      (N, C, H, W)
    """
    n, c, h, w = x_nchw.shape
    hw = h * w
    dtype = x_nchw.dtype

    # Free (bitcastable) reshapes only -- no transpose / pad HBM passes.
    x_flat = x_nchw.reshape(n, c, hw)
    w9 = weight.reshape(c, 9).astype(jnp.float32)   # keep taps in f32 (tiny)
    b2 = bias.reshape(c, 1).astype(jnp.float32)

    vmem_limit = _vmem_limit_bytes()
    tc, cs = _pick_tiles(n, c, hw, jnp.dtype(dtype).itemsize, vmem_limit)

    kernel = functools.partial(_dwconv_kernel, width=w, cs=cs)
    out_flat = pl.pallas_call(
        kernel,
        out_shape=jax.ShapeDtypeStruct((n, c, hw), dtype),
        grid_spec=pltpu.PrefetchScalarGridSpec(
            num_scalar_prefetch=0,
            grid=(n, c // tc),
            in_specs=[
                pl.BlockSpec((1, tc, hw), lambda ni, ci: (ni, ci, 0)),
                pl.BlockSpec((tc, 9), lambda ni, ci: (ci, 0)),
                pl.BlockSpec((tc, 1), lambda ni, ci: (ci, 0)),
            ],
            out_specs=pl.BlockSpec((1, tc, hw), lambda ni, ci: (ni, ci, 0)),
        ),
        compiler_params=pltpu.CompilerParams(
            dimension_semantics=("parallel", "parallel"),
            vmem_limit_bytes=vmem_limit,
        ),
    )(x_flat, w9, b2)

    return out_flat.reshape(n, c, h, w)


def _reference_dwconv(x_nchw, weight, bias):
    c = x_nchw.shape[1]
    out = jax.lax.conv_general_dilated(
        x_nchw, weight,
        window_strides=(1, 1),
        padding=((1, 1), (1, 1)),
        dimension_numbers=("NCHW", "OIHW", "NCHW"),
        feature_group_count=c,
    )
    return out + bias.reshape(1, c, 1, 1)


if __name__ == "__main__":
    key = jax.random.PRNGKey(0)
    # One channel-tiled case and one with C not a multiple of 128.
    for (n, c, h, w) in ((2, 128, 16, 16), (1, 96, 8, 16)):
        key, kx, kw, kb = jax.random.split(key, 4)
        x = jax.random.normal(kx, (n, c, h, w), dtype=jnp.float32)
        weight = jax.random.normal(kw, (c, 1, 3, 3), dtype=jnp.float32) * 0.1
        bias = jax.random.normal(kb, (c,), dtype=jnp.float32) * 0.1

        out = jax.block_until_ready(dwconv_attention(x, weight, bias))
        ref = _reference_dwconv(x, weight, bias)
        assert out.shape == (n, c, h, w)
        assert jnp.allclose(out, ref, atol=1e-4, rtol=1e-4), "mismatch vs reference"

    print("KERNEL_OK")
</pallas_src>

<mosaic_0001>
module attributes {stable_mosaic.version = 11 : i64} {
  func.func @_dwconv_kernel(%arg0: i32, %arg1: i32, %arg2: memref<1x64x256xf32, #tpu.memory_space<vmem>>, %arg3: memref<64x9xf32, #tpu.memory_space<vmem>>, %arg4: memref<64x1xf32, #tpu.memory_space<vmem>>, %arg5: memref<1x64x256xf32, #tpu.memory_space<vmem>>) attributes {dimension_semantics = [#tpu.dimension_semantics<parallel>, #tpu.dimension_semantics<parallel>], iteration_bounds = array<i64: 2, 2>, scalar_prefetch = 0 : i64, scratch_operands = 0 : i64, tpu.core_type = #tpu.core_type<tc>, window_params = [{transform_indices = @transform_0, window_bounds = array<i64: 1, 64, 256>}, {transform_indices = @transform_1, window_bounds = array<i64: 64, 9>}, {transform_indices = @transform_2, window_bounds = array<i64: 64, 1>}, {transform_indices = @transform_3, window_bounds = array<i64: 1, 64, 256>}]} {
    %0 = tpu.iota {dimensions = array<i32: 1>} : vector<1x256xi32>
    %c16_i32 = arith.constant 16 : i32
    %c0_i32 = arith.constant 0 : i32
    %1 = arith.cmpi eq, %c16_i32, %c0_i32 : i32
    %c1_i32 = arith.constant 1 : i32
    %2 = arith.select %1, %c1_i32, %c16_i32 : i32
    %3 = vector.broadcast %2 : i32 to vector<1x256xi32>
    %4 = arith.remsi %0, %3 : vector<1x256xi32>
    %c0_i32_0 = arith.constant 0 : i32
    %5 = vector.broadcast %c0_i32_0 : i32 to vector<1x256xi32>
    %6 = arith.cmpi ne, %4, %5 : vector<1x256xi32>
    %c0_i32_1 = arith.constant 0 : i32
    %7 = vector.broadcast %c0_i32_1 : i32 to vector<1x256xi32>
    %8 = arith.cmpi slt, %4, %7 : vector<1x256xi32>
    %c0_i32_2 = arith.constant 0 : i32
    %9 = arith.cmpi slt, %2, %c0_i32_2 : i32
    %10 = vector.broadcast %9 : i1 to vector<1x256xi1>
    %11 = vector.broadcast %10 : vector<1x256xi1> to vector<1x256xi1>
    %12 = arith.xori %8, %11 : vector<1x256xi1>
    %13 = arith.andi %12, %6 : vector<1x256xi1>
    %14 = vector.broadcast %2 : i32 to vector<1x256xi32>
    %15 = arith.addi %4, %14 : vector<1x256xi32>
    %16 = arith.select %13, %15, %4 : vector<1x256xi1>, vector<1x256xi32>
    %c15_i32 = arith.constant 15 : i32
    %17 = vector.broadcast %c15_i32 : i32 to vector<1x256xi32>
    %18 = arith.cmpi ne, %16, %17 : vector<1x256xi32>
    %19 = arith.extui %18 : vector<1x256xi1> to vector<1x256xi32>
    %20 = arith.sitofp %19 : vector<1x256xi32> to vector<1x256xf32>
    %c0_i32_3 = arith.constant 0 : i32
    %21 = vector.broadcast %c0_i32_3 : i32 to vector<1x256xi32>
    %22 = arith.cmpi ne, %16, %21 : vector<1x256xi32>
    %23 = arith.extui %22 : vector<1x256xi1> to vector<1x256xi32>
    %24 = arith.sitofp %23 : vector<1x256xi32> to vector<1x256xf32>
    %c16_i32_4 = arith.constant 16 : i32
    %25 = vector.broadcast %c16_i32_4 : i32 to vector<1x256xi32>
    %26 = arith.cmpi sge, %0, %25 : vector<1x256xi32>
    %27 = arith.extui %26 : vector<1x256xi1> to vector<1x256xi32>
    %28 = arith.sitofp %27 : vector<1x256xi32> to vector<1x256xf32>
    %c240_i32 = arith.constant 240 : i32
    %29 = vector.broadcast %c240_i32 : i32 to vector<1x256xi32>
    %30 = arith.cmpi slt, %0, %29 : vector<1x256xi32>
    %31 = arith.extui %30 : vector<1x256xi1> to vector<1x256xi32>
    %32 = arith.sitofp %31 : vector<1x256xi32> to vector<1x256xf32>
    %c0_i32_5 = arith.constant 0 : i32
    %c4_i32 = arith.constant 4 : i32
    %33 = arith.addi %c0_i32_5, %c4_i32 : i32
    %c1_i32_6 = arith.constant 1 : i32
    scf.for %arg6 = %c0_i32_5 to %33 step %c1_i32_6  : i32 {
      %c16_i32_8 = arith.constant 16 : i32
      %34 = arith.muli %arg6, %c16_i32_8 : i32
      %35 = tpu.assume_multiple %34, 16 : i32
      %c0 = arith.constant 0 : index
      %36 = arith.index_cast %35 : i32 to index
      %c0_9 = arith.constant 0 : index
      %37 = vector.load %arg2[%c0, %36, %c0_9] : memref<1x64x256xf32, #tpu.memory_space<vmem>>, vector<1x16x256xf32>
      %38 = vector.shape_cast %37 : vector<1x16x256xf32> to vector<16x256xf32>
      %39 = arith.index_cast %35 : i32 to index
      %c0_10 = arith.constant 0 : index
      %40 = vector.load %arg3[%39, %c0_10] : memref<64x9xf32, #tpu.memory_space<vmem>>, vector<16x9xf32>
      %41 = arith.index_cast %35 : i32 to index
      %c0_11 = arith.constant 0 : index
      %42 = vector.load %arg4[%41, %c0_11] : memref<64x1xf32, #tpu.memory_space<vmem>>, vector<16x1xf32>
      %43 = vector.broadcast %20 : vector<1x256xf32> to vector<16x256xf32>
      %44 = arith.mulf %38, %43 : vector<16x256xf32>
      %45 = vector.broadcast %24 : vector<1x256xf32> to vector<16x256xf32>
      %46 = arith.mulf %38, %45 : vector<16x256xf32>
      %c17_i32 = arith.constant 17 : i32
      %47 = tpu.dynamic_rotate %44 by %c17_i32 dim 1 : vector<16x256xf32>, i32 -> vector<16x256xf32>
      %48 = vector.extract_strided_slice %40 {offsets = [0, 0], sizes = [16, 1], strides = [1, 1]} : vector<16x9xf32> to vector<16x1xf32>
      %49 = vector.broadcast %48 : vector<16x1xf32> to vector<16x256xf32>
      %50 = arith.mulf %47, %49 : vector<16x256xf32>
      %c16_i32_12 = arith.constant 16 : i32
      %51 = tpu.dynamic_rotate %38 by %c16_i32_12 dim 1 : vector<16x256xf32>, i32 -> vector<16x256xf32>
      %52 = vector.extract_strided_slice %40 {offsets = [0, 1], sizes = [16, 1], strides = [1, 1]} : vector<16x9xf32> to vector<16x1xf32>
      %53 = vector.broadcast %52 : vector<16x1xf32> to vector<16x256xf32>
      %54 = arith.mulf %51, %53 : vector<16x256xf32>
      %55 = arith.addf %50, %54 : vector<16x256xf32>
      %c15_i32_13 = arith.constant 15 : i32
      %56 = tpu.dynamic_rotate %46 by %c15_i32_13 dim 1 : vector<16x256xf32>, i32 -> vector<16x256xf32>
      %57 = vector.extract_strided_slice %40 {offsets = [0, 2], sizes = [16, 1], strides = [1, 1]} : vector<16x9xf32> to vector<16x1xf32>
      %58 = vector.broadcast %57 : vector<16x1xf32> to vector<16x256xf32>
      %59 = arith.mulf %56, %58 : vector<16x256xf32>
      %60 = arith.addf %55, %59 : vector<16x256xf32>
      %c1_i32_14 = arith.constant 1 : i32
      %61 = tpu.dynamic_rotate %44 by %c1_i32_14 dim 1 : vector<16x256xf32>, i32 -> vector<16x256xf32>
      %62 = vector.extract_strided_slice %40 {offsets = [0, 3], sizes = [16, 1], strides = [1, 1]} : vector<16x9xf32> to vector<16x1xf32>
      %63 = vector.broadcast %62 : vector<16x1xf32> to vector<16x256xf32>
      %64 = arith.mulf %61, %63 : vector<16x256xf32>
      %65 = vector.extract_strided_slice %40 {offsets = [0, 4], sizes = [16, 1], strides = [1, 1]} : vector<16x9xf32> to vector<16x1xf32>
      %66 = vector.broadcast %65 : vector<16x1xf32> to vector<16x256xf32>
      %67 = arith.mulf %38, %66 : vector<16x256xf32>
      %68 = arith.addf %64, %67 : vector<16x256xf32>
      %c255_i32 = arith.constant 255 : i32
      %69 = tpu.dynamic_rotate %46 by %c255_i32 dim 1 : vector<16x256xf32>, i32 -> vector<16x256xf32>
      %70 = vector.extract_strided_slice %40 {offsets = [0, 5], sizes = [16, 1], strides = [1, 1]} : vector<16x9xf32> to vector<16x1xf32>
      %71 = vector.broadcast %70 : vector<16x1xf32> to vector<16x256xf32>
      %72 = arith.mulf %69, %71 : vector<16x256xf32>
      %73 = arith.addf %68, %72 : vector<16x256xf32>
      %c241_i32 = arith.constant 241 : i32
      %74 = tpu.dynamic_rotate %44 by %c241_i32 dim 1 : vector<16x256xf32>, i32 -> vector<16x256xf32>
      %75 = vector.extract_strided_slice %40 {offsets = [0, 6], sizes = [16, 1], strides = [1, 1]} : vector<16x9xf32> to vector<16x1xf32>
      %76 = vector.broadcast %75 : vector<16x1xf32> to vector<16x256xf32>
      %77 = arith.mulf %74, %76 : vector<16x256xf32>
      %c240_i32_15 = arith.constant 240 : i32
      %78 = tpu.dynamic_rotate %38 by %c240_i32_15 dim 1 : vector<16x256xf32>, i32 -> vector<16x256xf32>
      %79 = vector.extract_strided_slice %40 {offsets = [0, 7], sizes = [16, 1], strides = [1, 1]} : vector<16x9xf32> to vector<16x1xf32>
      %80 = vector.broadcast %79 : vector<16x1xf32> to vector<16x256xf32>
      %81 = arith.mulf %78, %80 : vector<16x256xf32>
      %82 = arith.addf %77, %81 : vector<16x256xf32>
      %c239_i32 = arith.constant 239 : i32
      %83 = tpu.dynamic_rotate %46 by %c239_i32 dim 1 : vector<16x256xf32>, i32 -> vector<16x256xf32>
      %84 = vector.extract_strided_slice %40 {offsets = [0, 8], sizes = [16, 1], strides = [1, 1]} : vector<16x9xf32> to vector<16x1xf32>
      %85 = vector.broadcast %84 : vector<16x1xf32> to vector<16x256xf32>
      %86 = arith.mulf %83, %85 : vector<16x256xf32>
      %87 = arith.addf %82, %86 : vector<16x256xf32>
      %88 = vector.broadcast %28 : vector<1x256xf32> to vector<16x256xf32>
      %89 = arith.mulf %60, %88 : vector<16x256xf32>
      %90 = arith.addf %73, %89 : vector<16x256xf32>
      %91 = vector.broadcast %32 : vector<1x256xf32> to vector<16x256xf32>
      %92 = arith.mulf %87, %91 : vector<16x256xf32>
      %93 = arith.addf %90, %92 : vector<16x256xf32>
      %94 = vector.broadcast %42 : vector<16x1xf32> to vector<16x256xf32>
      %95 = arith.addf %93, %94 : vector<16x256xf32>
      %c0_16 = arith.constant 0 : index
      %96 = arith.index_cast %35 : i32 to index
      %c0_17 = arith.constant 0 : index
      %97 = vector.load %arg5[%c0_16, %96, %c0_17] : memref<1x64x256xf32, #tpu.memory_space<vmem>>, vector<1x16x256xf32>
      %98 = vector.shape_cast %97 : vector<1x16x256xf32> to vector<16x256xf32>
      %99 = vector.shape_cast %95 : vector<16x256xf32> to vector<1x16x256xf32>
      tpu.vector_store %arg5[%c0_16, %96, %c0_17], %99 {strides = array<i32>} : memref<1x64x256xf32, #tpu.memory_space<vmem>>, vector<1x16x256xf32>,
    }
    %c4_i32_7 = arith.constant 4 : i32
    return
  }
  func.func @transform_0(%arg0: i32, %arg1: i32) -> (i32, i32, i32) {
    %c0_i32 = arith.constant 0 : i32
    %c0_i32_0 = arith.constant 0 : i32
    return %arg0, %arg1, %c0_i32 : i32, i32, i32
  }
  func.func @transform_1(%arg0: i32, %arg1: i32) -> (i32, i32) {
    %c0_i32 = arith.constant 0 : i32
    %c0_i32_0 = arith.constant 0 : i32
    return %arg1, %c0_i32 : i32, i32
  }
  func.func @transform_2(%arg0: i32, %arg1: i32) -> (i32, i32) {
    %c0_i32 = arith.constant 0 : i32
    %c0_i32_0 = arith.constant 0 : i32
    return %arg1, %c0_i32 : i32, i32
  }
  func.func @transform_3(%arg0: i32, %arg1: i32) -> (i32, i32, i32) {
    %c0_i32 = arith.constant 0 : i32
    %c0_i32_0 = arith.constant 0 : i32
    return %arg0, %arg1, %c0_i32 : i32, i32, i32
  }
}

</mosaic_0001>

<llo_original>
// kernel: dwconv_attention.1
$region0: #{dwconv_attention.1}
  #allocation0 [shape = 'u32[]', space=smem, size = 0x4, offset = 0x4, fixed_abs, tag = 'smem constant byte address 0x4 - core index']
  #allocation1 [shape = 'u32[72,128]{1,0:T(1,128)}', space=vmem, size = 0x9000, scoped, tag = 'internal scratch']
  %s0 = inlined_call_operand.vmem [shape: f32[2,128,256], index: 0, kind: input, shape index: {}]
  %s1 = inlined_call_operand.vmem [shape: f32[128,9], index: 1, kind: input, shape index: {}]
  %s2 = inlined_call_operand.vmem [shape: f32[128,1], index: 2, kind: input, shape index: {}]
  %s3 = inlined_call_operand.vmem [shape: f32[2,128,256], index: 3, kind: output, shape index: {}]
  %s4 = sld [smem:[#allocation0]]
  $region52: #{dwconv_attention.1} parent=0
    _
  %s6 = ssub.s32 1, %s4
  %s7 = scalar_select 0, %s6, %s4
  loop: start=0, step=1, limit=6
  $region2: #{dwconv_attention.1} parent=0 // loop_pre_header
    _
  $region3: #{dwconv_attention.1} parent=0 // loop_header
    %s9 = sphi 0, %s13
    %p10 = scmp.ge.s32.totalorder %s9, 6
    %s16 = sphi 0, %s28
    %s17 = sphi 0, %s24
    %s18 = sphi 0, %s16
    %s19 = sphi 0, %s17
    %s20 = sphi 0, %s18
    %s21 = sphi 0, %s19
    %s33 = sphi 0, %s35
    %s36 = sphi 0, %s33
    %s37 = sphi 0, %s36
    %s53 = sphi 0, %s37
    %s59 = sphi 0, %s61
    %s62 = sphi 0, %s59
    %s63 = sphi 0, %s62
    %s79 = sphi 0, %s63
    %s85 = sphi 0, %s87
    %s88 = sphi 0, %s85
    %s89 = sphi 0, %s88
    %s105 = sphi 0, %s89
    %s113 = sphi 0, %s115
    %s116 = sphi 0, %s113
    %s117 = sphi 0, %s116
    %s133 = sphi 0, %s117
  $region4: #{dwconv_attention.1} parent=0 // loop_header_branch
    %12 = sbr.rel (%p10) target = $region8
  $region5: #{dwconv_attention.1} parent=0 // loop_body
    %s14 = ssub.s32 %s9, 1
    %s15 = ssub.s32 %s9, 2
    %s22 = sadd.s32 1, %s17
    %p23 = scmp.ge.s32.totalorder %s22, 2
    %s24 = scalar_select %p23, 0, %s22
    %s25 = sadd.s32 1, %s16
    %s26 = scalar_select %p23, %s25, %s16
    %p27 = scmp.ge.s32.totalorder %s26, 2
    %s28 = scalar_select %p27, 0, %s26
    %s29 = ssub.s32 %s16, %s28
    %s30 = ssub.s32 %s17, %s24
    %s31 = sor.u32 %s29, %s30
    %p32 = scmp.eq.s32.totalorder %s31, 0
    %s34 = sadd.s32 %s33, 1
    %s35 = scalar_select %p32, %s33, %s34
    %p38 = pneg %p32
    %p39 = scmp.eq.s32.totalorder %s9, 3
    %p40 = por %p38, %p39
    %p41 = scmp.ne.s32.totalorder %s33, %s36
    %p42 = scmp.eq.s32.totalorder %s9, 0
    %p43 = por %p41, %p42
    %p44 = scmp.ne.s32.totalorder %s33, %s36
    %p45 = scmp.eq.s32.totalorder %s14, 3
    %p46 = por %p44, %p45
    %p47 = scmp.ne.s32.totalorder %s36, %s37
    %p48 = scmp.eq.s32.totalorder %s14, 0
    %p49 = por %p47, %p48
    %p50 = scmp.ne.s32.totalorder %s36, %s37
    %p51 = scmp.eq.s32.totalorder %s15, 3
    %p52 = por %p50, %p51
    %p54 = scmp.ne.s32.totalorder %s37, %s53
    %p55 = scmp.eq.s32.totalorder %s15, 0
    %p56 = por %p54, %p55
    %s57 = ssub.s32 %s17, %s24
    %p58 = scmp.eq.s32.totalorder %s57, 0
    %s60 = sadd.s32 %s59, 1
    %s61 = scalar_select %p58, %s59, %s60
    %p64 = pneg %p58
    %p65 = scmp.eq.s32.totalorder %s9, 3
    %p66 = por %p64, %p65
    %p67 = scmp.ne.s32.totalorder %s59, %s62
    %p68 = scmp.eq.s32.totalorder %s9, 0
    %p69 = por %p67, %p68
    %p70 = scmp.ne.s32.totalorder %s59, %s62
    %p71 = scmp.eq.s32.totalorder %s14, 3
    %p72 = por %p70, %p71
    %p73 = scmp.ne.s32.totalorder %s62, %s63
    %p74 = scmp.eq.s32.totalorder %s14, 0
    %p75 = por %p73, %p74
    %p76 = scmp.ne.s32.totalorder %s62, %s63
    %p77 = scmp.eq.s32.totalorder %s15, 3
    %p78 = por %p76, %p77
    %p80 = scmp.ne.s32.totalorder %s63, %s79
    %p81 = scmp.eq.s32.totalorder %s15, 0
    %p82 = por %p80, %p81
    %s83 = ssub.s32 %s17, %s24
    %p84 = scmp.eq.s32.totalorder %s83, 0
    %s86 = sadd.s32 %s85, 1
    %s87 = scalar_select %p84, %s85, %s86
    %p90 = pneg %p84
    %p91 = scmp.eq.s32.totalorder %s9, 3
    %p92 = por %p90, %p91
    %p93 = scmp.ne.s32.totalorder %s85, %s88
    %p94 = scmp.eq.s32.totalorder %s9, 0
    %p95 = por %p93, %p94
    %p96 = scmp.ne.s32.totalorder %s85, %s88
    %p97 = scmp.eq.s32.totalorder %s14, 3
    %p98 = por %p96, %p97
    %p99 = scmp.ne.s32.totalorder %s88, %s89
    %p100 = scmp.eq.s32.totalorder %s14, 0
    %p101 = por %p99, %p100
    %p102 = scmp.ne.s32.totalorder %s88, %s89
    %p103 = scmp.eq.s32.totalorder %s15, 3
    %p104 = por %p102, %p103
    %p106 = scmp.ne.s32.totalorder %s89, %s105
    %p107 = scmp.eq.s32.totalorder %s15, 0
    %p108 = por %p106, %p107
    %s109 = ssub.s32 %s16, %s28
    %s110 = ssub.s32 %s17, %s24
    %s111 = sor.u32 %s109, %s110
    %p112 = scmp.eq.s32.totalorder %s111, 0
    %s114 = sadd.s32 %s113, 1
    %s115 = scalar_select %p112, %s113, %s114
    %p118 = pneg %p112
    %p119 = scmp.eq.s32.totalorder %s9, 3
    %p120 = por %p118, %p119
    %p121 = scmp.ne.s32.totalorder %s113, %s116
    %p122 = scmp.eq.s32.totalorder %s9, 0
    %p123 = por %p121, %p122
    %p124 = scmp.ne.s32.totalorder %s113, %s116
    %p125 = scmp.eq.s32.totalorder %s14, 3
    %p126 = por %p124, %p125
    %p127 = scmp.ne.s32.totalorder %s116, %s117
    %p128 = scmp.eq.s32.totalorder %s14, 0
    %p129 = por %p127, %p128
    %p130 = scmp.ne.s32.totalorder %s116, %s117
    %p131 = scmp.eq.s32.totalorder %s15, 3
    %p132 = por %p130, %p131
    %p134 = scmp.ne.s32.totalorder %s117, %s133
    %p135 = scmp.eq.s32.totalorder %s15, 0
    %p136 = por %p134, %p135
    %p137 = scmp.le.s32.totalorder 1, %s9
    %p138 = scmp.lt.s32.totalorder %s9, 5
    %p139 = pnand %p137, %p138
    %p140 = pneg %p139
    // Predicated region
    $region9: #{dwconv_attention.1} parent=5 // pred_check
      _
    $region10: #{dwconv_attention.1} parent=5 // pred_check_branch
      %142 = sbr.rel (%p139) target = $region12
    $region11: #{dwconv_attention.1} parent=5 // pred_region
      %s143 = ssub.s32 %s9, 1
    $region12: #{dwconv_attention.1} parent=5 // pred_fallthru
      _
    %p144 = scmp.lt.s32.totalorder %s9, 4
    // Predicated region
    $region13: #{dwconv_attention.1} parent=5 // pred_check
      %p145 = pneg %p144
    $region14: #{dwconv_attention.1} parent=5 // pred_check_branch
      %147 = sbr.rel (%p145) target = $region16
    $region15: #{dwconv_attention.1} parent=5 // pred_region
      // Predicated region
      $region17: #{dwconv_attention.1} parent=15 // pred_check
        %p148 = pneg %p43
      $region18: #{dwconv_attention.1} parent=15 // pred_check_branch
        %150 = sbr.rel (%p148) target = $region20
      $region19: #{dwconv_attention.1} parent=15 // pred_region
        %s151 = smul.u32 8, %s17
        %p152 = scmp.lt.s32.totalorder %s16, 1
        %s153 = scalar_select %p152, %s16, 1
        %p154 = scmp.lt.s32.totalorder %s151, 15
        %s155 = scalar_select %p154, %s151, 15
        %s156 = smul.addr %s155, 2
        %s157 = smul.addr %s153, 32
        %s158 = sadd.s32 %s156, %s157
        %s159 = smul.addr %s158, 8
        %s160 = scalar_lea.vmem %s0, %s159
        %s161 = smul.u32 8, %s17
      $region20: #{dwconv_attention.1} parent=15 // pred_fallthru
        _
      // Predicated region
      $region21: #{dwconv_attention.1} parent=15 // pred_check
        %p162 = pneg %p69
      $region22: #{dwconv_attention.1} parent=15 // pred_check_branch
        %164 = sbr.rel (%p162) target = $region24
      $region23: #{dwconv_attention.1} parent=15 // pred_region
        %s165 = smul.u32 8, %s17
        %p166 = scmp.lt.s32.totalorder %s165, 15
        %s167 = scalar_select %p166, %s165, 15
        %s168 = smul.addr %s167, 8
        %s169 = scalar_lea.vmem %s1, %s168
        %s170 = smul.u32 8, %s17
      $region24: #{dwconv_attention.1} parent=15 // pred_fallthru
        _
      // Predicated region
      $region25: #{dwconv_attention.1} parent=15 // pred_check
        %p171 = pneg %p95
      $region26: #{dwconv_attention.1} parent=15 // pred_check_branch
        %173 = sbr.rel (%p171) target = $region28
      $region27: #{dwconv_attention.1} parent=15 // pred_region
        %s174 = smul.u32 8, %s17
        %p175 = scmp.lt.s32.totalorder %s174, 15
        %s176 = scalar_select %p175, %s174, 15
        %s177 = smul.addr %s176, 8
        %s178 = scalar_lea.vmem %s2, %s177
        %s179 = smul.u32 8, %s17
      $region28: #{dwconv_attention.1} parent=15 // pred_fallthru
        _
    $region16: #{dwconv_attention.1} parent=5 // pred_fallthru
      _
    %p180 = scmp.le.s32.totalorder 1, %s9
    %p181 = scmp.lt.s32.totalorder %s9, 5
    %p182 = pnand %p180, %p181
    %p183 = pneg %p182
    // Predicated region
    $region29: #{dwconv_attention.1} parent=5 // pred_check
      _
    $region30: #{dwconv_attention.1} parent=5 // pred_check_branch
      %185 = sbr.rel (%p182) target = $region32
    $region31: #{dwconv_attention.1} parent=5 // pred_region
      %s186 = ssub.s32 %s9, 1
      %s187 = smul.u32 8, %s19
      %p188 = scmp.lt.s32.totalorder %s18, 1
      %s189 = scalar_select %p188, %s18, 1
      %p190 = scmp.lt.s32.totalorder %s187, 15
      %s191 = scalar_select %p190, %s187, 15
      %s192 = smul.addr %s191, 2
      %s193 = smul.addr %s189, 32
      %s194 = sadd.s32 %s192, %s193
      %s195 = smul.addr %s194, 8
      %s196 = scalar_lea.vmem %s0, %s195
      %p197 = pneg %p49
      %p198 = pneg %p46
      %s199 = smul.u32 8, %s19
      %p200 = scmp.lt.s32.totalorder %s199, 15
      %s201 = scalar_select %p200, %s199, 15
      %s202 = smul.addr %s201, 8
      %s203 = scalar_lea.vmem %s1, %s202
      %p204 = pneg %p75
      %p205 = pneg %p72
      %s206 = smul.u32 8, %s19
      %p207 = scmp.lt.s32.totalorder %s206, 15
      %s208 = scalar_select %p207, %s206, 15
      %s209 = smul.addr %s208, 8
      %s210 = scalar_lea.vmem %s2, %s209
      %p211 = pneg %p101
      %p212 = pneg %p98
      %p213 = pneg %p129
      %p214 = pneg %p126
      %s215 = smul.u32 8, %s19
      %p216 = scmp.lt.s32.totalorder %s18, 1
      %s217 = scalar_select %p216, %s18, 1
      %p218 = scmp.lt.s32.totalorder %s215, 15
      %s219 = scalar_select %p218, %s215, 15
      %s220 = smul.addr %s219, 2
      %s221 = smul.addr %s217, 32
      %s222 = sadd.s32 %s220, %s221
      %s223 = smul.addr %s222, 8
      %s224 = scalar_lea.vmem %s3, %s223
      %s225 = smul.u32 8, %s19
      %p226 = scmp.lt.s32.totalorder %s18, 1
      %s227 = scalar_select %p226, %s18, 1
      %p228 = scmp.lt.s32.totalorder %s225, 15
      %s229 = scalar_select %p228, %s225, 15
      %s230 = smul.addr %s229, 2
      %s231 = smul.addr %s227, 32
      %s232 = sadd.s32 %s230, %s231
      %s233 = smul.addr %s232, 8
      %s234 = scalar_lea.vmem %s0, %s233
      %s235 = smul.u32 8, %s19
      %s236 = smul.u32 8, %s19
      %p237 = scmp.lt.s32.totalorder %s236, 15
      %s238 = scalar_select %p237, %s236, 15
      %s239 = smul.addr %s238, 8
      %s240 = scalar_lea.vmem %s1, %s239
      %s241 = smul.u32 8, %s19
      %s242 = smul.u32 8, %s19
      %p243 = scmp.lt.s32.totalorder %s242, 15
      %s244 = scalar_select %p243, %s242, 15
      %s245 = smul.addr %s244, 8
      %s246 = scalar_lea.vmem %s2, %s245
      %s247 = smul.u32 8, %s19
      %s248 = smul.u32 8, %s19
      %p249 = scmp.lt.s32.totalorder %s18, 1
      %s250 = scalar_select %p249, %s18, 1
      %p251 = scmp.lt.s32.totalorder %s248, 15
      %s252 = scalar_select %p251, %s248, 15
      %s253 = smul.addr %s252, 2
      %s254 = smul.addr %s250, 32
      %s255 = sadd.s32 %s253, %s254
      %s256 = smul.addr %s255, 8
      %s257 = scalar_lea.vmem %s3, %s256
      %s258 = smul.u32 8, %s19
      %v259 = vlaneseq
      %v260 = vand.u32 %v259, 127
      %v261 = vadd.s32 %v260, 128
      %vm262 = vcmp.lt.s32.totalorder %v260, 0
      %v263 = vsub.s32 0, %v260
      %v264 = vsel %vm262, %v263, %v260
      %v265 = vshrl.u32 %v264, 4
      %v266 = vand.u32 %v264, 15
      %v267 = vsub.s32 0, %v266
      %v268 = vsel %vm262, %v267, %v266
      %vm269 = vcmp.lt.s32.totalorder %v261, 0
      %v270 = vsub.s32 0, %v261
      %v271 = vsel %vm269, %v270, %v261
      %v272 = vshrl.u32 %v271, 4
      %v273 = vand.u32 %v271, 15
      %v274 = vsub.s32 0, %v273
      %v275 = vsel %vm269, %v274, %v273
      %vm276 = vcmp.ne.s32.totalorder %v268, 0
      %vm277 = vcmp.ne.s32.totalorder %v275, 0
      %vm278 = vcmp.lt.s32.totalorder %v268, 0
      %vm279 = vcmp.lt.s32.totalorder %v275, 0
      %vm280 = vmand %vm278, %vm276
      %vm281 = vmand %vm279, %vm277
      %v282 = vadd.s32 %v268, 16
      %v283 = vadd.s32 %v275, 16
      %v284 = vsel %vm280, %v282, %v268
      %v285 = vsel %vm281, %v283, %v275
      %vm286 = vcmp.ne.s32.totalorder %v284, 15
      %vm287 = vcmp.ne.s32.totalorder %v285, 15
      %v288 = vsel %vm286, 1, 0
      %v289 = vsel %vm287, 1, 0
      %v290 = vcvt.s32.f32 %v288
      %v291 = vcvt.s32.f32 %v289
      %vm292 = vcmp.ne.s32.totalorder %v284, 0
      %vm293 = vcmp.ne.s32.totalorder %v285, 0
      %v294 = vsel %vm292, 1, 0
      %v295 = vsel %vm293, 1, 0
      %v296 = vcvt.s32.f32 %v294
      %v297 = vcvt.s32.f32 %v295
      %vm298 = vcmp.ge.s32.totalorder %v260, 16
      %vm299 = vcmp.ge.s32.totalorder %v261, 16
      %v300 = vsel %vm298, 1, 0
      %v301 = vsel %vm299, 1, 0
      %v302 = vcvt.s32.f32 %v300
      %v303 = vcvt.s32.f32 %v301
      %vm304 = vcmp.lt.s32.totalorder %v260, 240
      %vm305 = vcmp.lt.s32.totalorder %v261, 240
      %v306 = vsel %vm304, 1, 0
      %v307 = vsel %vm305, 1, 0
      %v308 = vcvt.s32.f32 %v306
      %v309 = vcvt.s32.f32 %v307
      loop: start=0, step=1, limit=4
      $region33: #{dwconv_attention.1} parent=31 // loop_pre_header
        _
      $region34: #{dwconv_attention.1} parent=31 // loop_header
        %s311 = sphi 0, %s315
        %p312 = scmp.ge.s32.totalorder %s311, 4
      $region35: #{dwconv_attention.1} parent=31 // loop_header_branch
        %314 = sbr.rel (%p312) target = $region39
      $region36: #{dwconv_attention.1} parent=31 // loop_body
        %s316 = smul.u32 %s311, 16
        %s317 = sshra.s32 %s316, 3
        %s318 = sand.u32 %s316, 7
        %s319 = smul.u32 %s317, 2
        %s320 = smul.addr %s319, 8
        %s321 = scalar_lea.vmem %s234, %s320
        %v322 = vld [vmem:[%s321] sm:$0xff]
        %v323 = vld [vmem:[%s321 + $0x8] sm:$0xff]
        %v324 = vld [vmem:[%s321 + $0x10] sm:$0xff]
        %v325 = vld [vmem:[%s321 + $0x18] sm:$0xff]
        %s326 = scalar_lea.vmem %s240, %s316
        %v327 = vld [vmem:[%s326] sm:$0xff]
        %v328 = vld [vmem:[%s326 + $0x8] sm:$0xff]
        %s329 = scalar_lea.vmem %s246, %s316
        %v330 = vld [vmem:[%s329] sm:$0xff]
        %v331 = vld [vmem:[%s329 + $0x8] sm:$0xff]
        %v332 = vmul.f32 %v322, %v290
        %v333 = vmul.f32 %v323, %v291
        %v334 = vmul.f32 %v324, %v290
        %v335 = vmul.f32 %v325, %v291
        %v336 = vmul.f32 %v322, %v296
        %v337 = vmul.f32 %v323, %v297
        %v338 = vmul.f32 %v324, %v296
        %v339 = vmul.f32 %v325, %v297
        %340 = vrot.lane.b32.xlu0 %v332, 17
        %v341 = vpop.permute.xlu0 %340
        %342 = vrot.lane.b32.xlu0 %v334, 17
        %v343 = vpop.permute.xlu0 %342
        %344 = vrot.lane.b32.xlu0 %v333, 17
        %v345 = vpop.permute.xlu0 %344
        %346 = vrot.lane.b32.xlu0 %v335, 17
        %v347 = vpop.permute.xlu0 %346
        %vm348 = vcmp.lt.s32.totalorder %v260, 17
        %v349 = vsel %vm348, %v341, %v345
        %v350 = vsel %vm348, %v343, %v347
        %v351 = vsel %vm348, %v345, %v341
        %v352 = vsel %vm348, %v347, %v343
        %354 = vset.pattern.permute.xlu0 0
        %355 = vperm.xlu0 %354, %v327
        %v356 = vpop.permute.xlu0 %355
        %359 = vset.pattern.permute.xlu0 0
        %360 = vperm.xlu0 %359, %v328
        %v361 = vpop.permute.xlu0 %360
        %v363 = vmul.f32 %v351, %v356
        %v364 = vmul.f32 %v349, %v356
        %v365 = vmul.f32 %v352, %v361
        %v366 = vmul.f32 %v350, %v361
        %367 = vrot.lane.b32.xlu0 %v322, 16
        %v368 = vpop.permute.xlu0 %367
        %369 = vrot.lane.b32.xlu0 %v324, 16
        %v370 = vpop.permute.xlu0 %369
        %371 = vrot.lane.b32.xlu0 %v323, 16
        %v372 = vpop.permute.xlu0 %371
        %373 = vrot.lane.b32.xlu0 %v325, 16
        %v374 = vpop.permute.xlu0 %373
        %vm375 = vcmp.lt.s32.totalorder %v260, 16
        %v376 = vsel %vm375, %v368, %v372
        %v377 = vsel %vm375, %v370, %v374
        %v378 = vsel %vm375, %v372, %v368
        %v379 = vsel %vm375, %v374, %v370
        %380 = vset.pattern.permute.xlu0 1
        %381 = vperm.xlu0 %380, %v327
        %v382 = vpop.permute.xlu0 %381
        %384 = vset.pattern.permute.xlu0 1
        %385 = vperm.xlu0 %384, %v328
        %v386 = vpop.permute.xlu0 %385
        %v388 = vmul.f32 %v378, %v382
        %v389 = vmul.f32 %v376, %v382
        %v390 = vmul.f32 %v379, %v386
        %v391 = vmul.f32 %v377, %v386
        %v392 = vadd.f32 %v363, %v388
        %v393 = vadd.f32 %v364, %v389
        %v394 = vadd.f32 %v365, %v390
        %v395 = vadd.f32 %v366, %v391
        %396 = vrot.lane.b32.xlu0 %v336, 15
        %v397 = vpop.permute.xlu0 %396
        %398 = vrot.lane.b32.xlu0 %v338, 15
        %v399 = vpop.permute.xlu0 %398
        %400 = vrot.lane.b32.xlu0 %v337, 15
        %v401 = vpop.permute.xlu0 %400
        %402 = vrot.lane.b32.xlu0 %v339, 15
        %v403 = vpop.permute.xlu0 %402
        %vm404 = vcmp.lt.s32.totalorder %v260, 15
        %v405 = vsel %vm404, %v397, %v401
        %v406 = vsel %vm404, %v399, %v403
        %v407 = vsel %vm404, %v401, %v397
        %v408 = vsel %vm404, %v403, %v399
        %409 = vset.pattern.permute.xlu0 2
        %410 = vperm.xlu0 %409, %v327
        %v411 = vpop.permute.xlu0 %410
        %413 = vset.pattern.permute.xlu0 2
        %414 = vperm.xlu0 %413, %v328
        %v415 = vpop.permute.xlu0 %414
        %v417 = vmul.f32 %v407, %v411
        %v418 = vmul.f32 %v405, %v411
        %v419 = vmul.f32 %v408, %v415
        %v420 = vmul.f32 %v406, %v415
        %v421 = vadd.f32 %v392, %v417
        %v422 = vadd.f32 %v393, %v418
        %v423 = vadd.f32 %v394, %v419
        %v424 = vadd.f32 %v395, %v420
        %425 = vrot.lane.b32.xlu0 %v332, 1
        %v426 = vpop.permute.xlu0 %425
        %427 = vrot.lane.b32.xlu0 %v334, 1
        %v428 = vpop.permute.xlu0 %427
        %429 = vrot.lane.b32.xlu0 %v333, 1
        %v430 = vpop.permute.xlu0 %429
        %431 = vrot.lane.b32.xlu0 %v335, 1
        %v432 = vpop.permute.xlu0 %431
        %vm433 = vcmp.lt.s32.totalorder %v260, 1
        %v434 = vsel %vm433, %v426, %v430
        %v435 = vsel %vm433, %v428, %v432
        %v436 = vsel %vm433, %v430, %v426
        %v437 = vsel %vm433, %v432, %v428
        %438 = vset.pattern.permute.xlu0 3
        %439 = vperm.xlu0 %438, %v327
        %v440 = vpop.permute.xlu0 %439
        %442 = vset.pattern.permute.xlu0 3
        %443 = vperm.xlu0 %442, %v328
        %v444 = vpop.permute.xlu0 %443
        %v446 = vmul.f32 %v436, %v440
        %v447 = vmul.f32 %v434, %v440
        %v448 = vmul.f32 %v437, %v444
        %v449 = vmul.f32 %v435, %v444
        %450 = vset.pattern.permute.xlu0 4
        %451 = vperm.xlu0 %450, %v327
        %v452 = vpop.permute.xlu0 %451
        %454 = vset.pattern.permute.xlu0 4
        %455 = vperm.xlu0 %454, %v328
        %v456 = vpop.permute.xlu0 %455
        %v458 = vmul.f32 %v322, %v452
        %v459 = vmul.f32 %v323, %v452
        %v460 = vmul.f32 %v324, %v456
        %v461 = vmul.f32 %v325, %v456
        %v462 = vadd.f32 %v446, %v458
        %v463 = vadd.f32 %v447, %v459
        %v464 = vadd.f32 %v448, %v460
        %v465 = vadd.f32 %v449, %v461
        %466 = vrot.lane.b32.xlu0 %v336, 127
        %v467 = vpop.permute.xlu0 %466
        %468 = vrot.lane.b32.xlu0 %v338, 127
        %v469 = vpop.permute.xlu0 %468
        %470 = vrot.lane.b32.xlu0 %v337, 127
        %v471 = vpop.permute.xlu0 %470
        %472 = vrot.lane.b32.xlu0 %v339, 127
        %v473 = vpop.permute.xlu0 %472
        %vm474 = vcmp.lt.s32.totalorder %v260, 127
        %v475 = vsel %vm474, %v467, %v471
        %v476 = vsel %vm474, %v469, %v473
        %v477 = vsel %vm474, %v471, %v467
        %v478 = vsel %vm474, %v473, %v469
        %479 = vset.pattern.permute.xlu0 5
        %480 = vperm.xlu0 %479, %v327
        %v481 = vpop.permute.xlu0 %480
        %483 = vset.pattern.permute.xlu0 5
        %484 = vperm.xlu0 %483, %v328
        %v485 = vpop.permute.xlu0 %484
        %v487 = vmul.f32 %v475, %v481
        %v488 = vmul.f32 %v477, %v481
        %v489 = vmul.f32 %v476, %v485
        %v490 = vmul.f32 %v478, %v485
        %v491 = vadd.f32 %v462, %v487
        %v492 = vadd.f32 %v463, %v488
        %v493 = vadd.f32 %v464, %v489
        %v494 = vadd.f32 %v465, %v490
        %495 = vrot.lane.b32.xlu0 %v332, 113
        %v496 = vpop.permute.xlu0 %495
        %497 = vrot.lane.b32.xlu0 %v334, 113
        %v498 = vpop.permute.xlu0 %497
        %499 = vrot.lane.b32.xlu0 %v333, 113
        %v500 = vpop.permute.xlu0 %499
        %501 = vrot.lane.b32.xlu0 %v335, 113
        %v502 = vpop.permute.xlu0 %501
        %vm503 = vcmp.lt.s32.totalorder %v260, 113
        %v504 = vsel %vm503, %v496, %v500
        %v505 = vsel %vm503, %v498, %v502
        %v506 = vsel %vm503, %v500, %v496
        %v507 = vsel %vm503, %v502, %v498
        %508 = vset.pattern.permute.xlu0 6
        %509 = vperm.xlu0 %508, %v327
        %v510 = vpop.permute.xlu0 %509
        %512 = vset.pattern.permute.xlu0 6
        %513 = vperm.xlu0 %512, %v328
        %v514 = vpop.permute.xlu0 %513
        %v516 = vmul.f32 %v504, %v510
        %v517 = vmul.f32 %v506, %v510
        %v518 = vmul.f32 %v505, %v514
        %v519 = vmul.f32 %v507, %v514
        %520 = vrot.lane.b32.xlu0 %v322, 112
        %v521 = vpop.permute.xlu0 %520
        %522 = vrot.lane.b32.xlu0 %v324, 112
        %v523 = vpop.permute.xlu0 %522
        %524 = vrot.lane.b32.xlu0 %v323, 112
        %v525 = vpop.permute.xlu0 %524
        %526 = vrot.lane.b32.xlu0 %v325, 112
        %v527 = vpop.permute.xlu0 %526
        %vm528 = vcmp.lt.s32.totalorder %v260, 112
        %v529 = vsel %vm528, %v521, %v525
        %v530 = vsel %vm528, %v523, %v527
        %v531 = vsel %vm528, %v525, %v521
        %v532 = vsel %vm528, %v527, %v523
        %533 = vset.pattern.permute.xlu0 7
        %534 = vperm.xlu0 %533, %v327
        %v535 = vpop.permute.xlu0 %534
        %537 = vset.pattern.permute.xlu0 7
        %538 = vperm.xlu0 %537, %v328
        %v539 = vpop.permute.xlu0 %538
        %v541 = vmul.f32 %v529, %v535
        %v542 = vmul.f32 %v531, %v535
        %v543 = vmul.f32 %v530, %v539
        %v544 = vmul.f32 %v532, %v539
        %v545 = vadd.f32 %v516, %v541
        %v546 = vadd.f32 %v517, %v542
        %v547 = vadd.f32 %v518, %v543
        %v548 = vadd.f32 %v519, %v544
        %549 = vrot.lane.b32.xlu0 %v336, 111
        %v550 = vpop.permute.xlu0 %549
        %551 = vrot.lane.b32.xlu0 %v338, 111
        %v552 = vpop.permute.xlu0 %551
        %553 = vrot.lane.b32.xlu0 %v337, 111
        %v554 = vpop.permute.xlu0 %553
        %555 = vrot.lane.b32.xlu0 %v339, 111
        %v556 = vpop.permute.xlu0 %555
        %vm557 = vcmp.lt.s32.totalorder %v260, 111
        %v558 = vsel %vm557, %v550, %v554
        %v559 = vsel %vm557, %v552, %v556
        %v560 = vsel %vm557, %v554, %v550
        %v561 = vsel %vm557, %v556, %v552
        %562 = vset.pattern.permute.xlu0 8
        %563 = vperm.xlu0 %562, %v327
        %v564 = vpop.permute.xlu0 %563
        %566 = vset.pattern.permute.xlu0 8
        %567 = vperm.xlu0 %566, %v328
        %v568 = vpop.permute.xlu0 %567
        %v570 = vmul.f32 %v558, %v564
        %v571 = vmul.f32 %v560, %v564
        %v572 = vmul.f32 %v559, %v568
        %v573 = vmul.f32 %v561, %v568
        %v574 = vadd.f32 %v545, %v570
        %v575 = vadd.f32 %v546, %v571
        %v576 = vadd.f32 %v547, %v572
        %v577 = vadd.f32 %v548, %v573
        %v578 = vmul.f32 %v421, %v302
        %v579 = vmul.f32 %v422, %v303
        %v580 = vmul.f32 %v423, %v302
        %v581 = vmul.f32 %v424, %v303
        %v582 = vadd.f32 %v491, %v578
        %v583 = vadd.f32 %v492, %v579
        %v584 = vadd.f32 %v493, %v580
        %v585 = vadd.f32 %v494, %v581
        %v586 = vmul.f32 %v574, %v308
        %v587 = vmul.f32 %v575, %v309
        %v588 = vmul.f32 %v576, %v308
        %v589 = vmul.f32 %v577, %v309
        %v590 = vadd.f32 %v582, %v586
        %v591 = vadd.f32 %v583, %v587
        %v592 = vadd.f32 %v584, %v588
        %v593 = vadd.f32 %v585, %v589
        %595 = vset.pattern.permute.xlu0 0
        %596 = vperm.xlu0 %595, %v330
        %v597 = vpop.permute.xlu0 %596
        %600 = vset.pattern.permute.xlu0 0
        %601 = vperm.xlu0 %600, %v331
        %v602 = vpop.permute.xlu0 %601
        %v604 = vadd.f32 %v590, %v597
        %v605 = vadd.f32 %v591, %v597
        %v606 = vadd.f32 %v592, %v602
        %v607 = vadd.f32 %v593, %v602
        %s608 = smul.addr %s319, 8
        %s609 = scalar_lea.vmem %s257, %s608
        %610 = vst [vmem:[%s609] sm:$0xff] %v604
        %611 = vst [vmem:[%s609 + $0x8] sm:$0xff] %v605
        %612 = vst [vmem:[%s609 + $0x10] sm:$0xff] %v606
        %613 = vst [vmem:[%s609 + $0x18] sm:$0xff] %v607
      $region37: #{dwconv_attention.1} parent=31 // loop_footer
        %s315 = sadd.s32 1, %s311
      $region38: #{dwconv_attention.1} parent=31 // loop_footer_branch
        %310 = sbr.rel target = $region34
      $region39: #{dwconv_attention.1} parent=31 // loop_exit
        _
      %s614 = smul.u32 8, %s19
      %p615 = scmp.lt.s32.totalorder %s18, 1
      %s616 = scalar_select %p615, %s18, 1
      %p617 = scmp.lt.s32.totalorder %s614, 15
      %s618 = scalar_select %p617, %s614, 15
      %s619 = smul.addr %s618, 2
      %s620 = smul.addr %s616, 32
      %s621 = sadd.s32 %s619, %s620
      %s622 = smul.addr %s621, 8
      %s623 = scalar_lea.vmem %s3, %s622
      // Predicated region
      $region40: #{dwconv_attention.1} parent=31 // pred_check
        %p624 = pneg %p126
      $region41: #{dwconv_attention.1} parent=31 // pred_check_branch
        %626 = sbr.rel (%p624) target = $region43
      $region42: #{dwconv_attention.1} parent=31 // pred_region
        %s627 = smul.u32 8, %s19
      $region43: #{dwconv_attention.1} parent=31 // pred_fallthru
        _
    $region32: #{dwconv_attention.1} parent=5 // pred_fallthru
      _
    %p628 = scmp.le.s32.totalorder 2, %s9
    // Predicated region
    $region44: #{dwconv_attention.1} parent=5 // pred_check
      %p629 = pneg %p628
    $region45: #{dwconv_attention.1} parent=5 // pred_check_branch
      %631 = sbr.rel (%p629) target = $region47
    $region46: #{dwconv_attention.1} parent=5 // pred_region
      %s632 = ssub.s32 %s9, 2
      // Predicated region
      $region48: #{dwconv_attention.1} parent=46 // pred_check
        %p633 = pneg %p132
      $region49: #{dwconv_attention.1} parent=46 // pred_check_branch
        %635 = sbr.rel (%p633) target = $region51
      $region50: #{dwconv_attention.1} parent=46 // pred_region
        %s636 = smul.u32 8, %s21
        %p637 = scmp.lt.s32.totalorder %s20, 1
        %s638 = scalar_select %p637, %s20, 1
        %p639 = scmp.lt.s32.totalorder %s636, 15
        %s640 = scalar_select %p639, %s636, 15
        %s641 = smul.addr %s640, 2
        %s642 = smul.addr %s638, 32
        %s643 = sadd.s32 %s641, %s642
        %s644 = smul.addr %s643, 8
        %s645 = scalar_lea.vmem %s3, %s644
      $region51: #{dwconv_attention.1} parent=46 // pred_fallthru
        _
    $region47: #{dwconv_attention.1} parent=5 // pred_fallthru
      _
  $region6: #{dwconv_attention.1} parent=0 // loop_footer
    %s13 = sadd.s32 1, %s9
  $region7: #{dwconv_attention.1} parent=0 // loop_footer_branch
    %8 = sbr.rel target = $region3
  $region8: #{dwconv_attention.1} parent=0 // loop_exit
    _

</llo_original>
